<compile_context>
chip_gen: v5e
topology: v5e:2x2
jax: 0.10.0
libtpu: 0.0.40
codegen_flags: <defaults>
</compile_context>

<pallas_src>
import math

import jax
import jax.numpy as jnp
from jax.experimental import pallas as pl
from jax.experimental.pallas import tpu as pltpu


def _round_up(x: int, m: int) -> int:
    return ((x + m - 1) // m) * m


def _pick_tile(requested, dim, granule):
    """Legal TPU tile size along one axis: either the full dim (always legal),
    or a multiple of `granule` that does not exceed the dim."""
    if requested is None or requested >= dim:
        return dim
    t = max(granule, (requested // granule) * granule)
    return min(t, dim)


def _sinusoidal_kernel(x_ref, w_ref, o_ref):
    # x_ref: [TILE_N, 1]   f32 (sequence positions on the sublane axis)
    # w_ref: [1, TILE_D]   f32 (embedding dim on the lane axis)
    # o_ref: [TILE_N, TILE_D] out_dtype
    # One broadcast multiply on the VPU (kept in f32), cast at the store.
    o_ref[...] = (x_ref[...] * w_ref[...]).astype(o_ref.dtype)


def make_weights(embedding_dim: int, theta: float = 10000.0) -> jnp.ndarray:
    """Deterministic buffer identical to the PyTorch __init__ (sin/cos of the
    constant div_term interleaved even/odd)."""
    half = jnp.arange(0, embedding_dim, 2, dtype=jnp.float32)
    div_term = jnp.exp(half * (-(math.log(theta) / embedding_dim)))
    weights = jnp.zeros((embedding_dim,), dtype=jnp.float32)
    n_even = weights[0::2].shape[0]
    n_odd = weights[1::2].shape[0]
    # NOTE: the PyTorch module implicitly assumes even embedding_dim; for odd D
    # we truncate the cos half (most implementations do the same).
    weights = weights.at[0::2].set(jnp.sin(div_term[:n_even]))
    weights = weights.at[1::2].set(jnp.cos(div_term[:n_odd]))
    return weights


def sinusoidal_embedding(x: jnp.ndarray, weights: jnp.ndarray, *,
                         out_dtype=jnp.float32,
                         target_block_bytes: int = 4 * 1024 * 1024,
                         tile_n: int | None = None,
                         tile_d: int | None = None) -> jnp.ndarray:
    """x: [N], weights: [D] -> [N, D] == x[:, None] * weights[None, :].

    out_dtype=jnp.bfloat16 halves HBM write traffic (multiply stays f32);
    default float32 matches the PyTorch module bit-for-bit.
    """
    n = x.shape[0]
    d = weights.shape[0]
    out_itemsize = jnp.dtype(out_dtype).itemsize
    # Sublane granule for the output tiling: (8,128) for f32, (16,128) for bf16.
    sub = 16 if out_itemsize < 4 else 8

    # Lane axis (D): one full-width tile when D is modest (weight row DMA'd
    # once and resident; fully contiguous output writes); 1024-lane tiles else.
    if tile_d is None:
        tile_d = d if d <= 2048 else 1024
    tile_d = _pick_tile(tile_d, d, 128)

    # Sublane axis (N): size the block so (output block + 128-lane-padded x
    # block) ~= target_block_bytes. Double-buffered (~2x) that still fits every
    # generation's scoped-VMEM default, including v5e's 16 MiB.
    per_row_bytes = _round_up(tile_d, 128) * out_itemsize + 128 * 4
    if tile_n is None:
        tile_n = max(sub, target_block_bytes // per_row_bytes)
    tile_n = _pick_tile(tile_n, n, sub)

    n_tiles = pl.cdiv(n, tile_n)
    d_tiles = pl.cdiv(d, tile_d)

    x2 = x.astype(jnp.float32).reshape(n, 1)        # cheap reshape, no padding copy
    w2 = weights.astype(jnp.float32).reshape(1, d)

    cost = pl.CostEstimate(
        flops=n * d,
        transcendentals=0,
        bytes_accessed=n * d * out_itemsize + (n + d) * 4,
    )

    return pl.pallas_call(
        _sinusoidal_kernel,
        out_shape=jax.ShapeDtypeStruct((n, d), out_dtype),
        grid_spec=pltpu.PrefetchScalarGridSpec(
            num_scalar_prefetch=0,
            # N outer / D inner: x's block index is constant along the inner
            # axis, so the strided (tile_n, 1) x DMA is issued only n_tiles
            # times; the cheap lane-dense weight row is the re-fetched one.
            grid=(n_tiles, d_tiles),
            in_specs=[
                pl.BlockSpec((tile_n, 1), lambda i, j: (i, 0)),      # x rows
                pl.BlockSpec((1, tile_d), lambda i, j: (0, j)),      # weight row
            ],
            out_specs=pl.BlockSpec((tile_n, tile_d), lambda i, j: (i, j)),
        ),
        compiler_params=pltpu.CompilerParams(
            dimension_semantics=("parallel", "parallel"),
        ),
        cost_estimate=cost,
    )(x2, w2)


if __name__ == "__main__":
    key = jax.random.PRNGKey(0)

    # --- module-sized example: seq=8, hidden=32 (D < 128 => block == full D) ---
    N, D = 8, 32
    x = jax.random.normal(key, (N,), dtype=jnp.float32) * 10.0
    weights = make_weights(D, theta=10000.0)
    emb = jax.block_until_ready(sinusoidal_embedding(x, weights))
    ref = x[:, None] * weights[None, :]
    assert emb.shape == (N, D) and emb.dtype == jnp.float32
    assert jnp.allclose(emb, ref, atol=1e-6, rtol=1e-6)

    # --- ragged multi-tile grid: masked boundary blocks on both axes ---
    N2, D2 = 300, 200
    x2 = jax.random.normal(jax.random.PRNGKey(0), (N2,), dtype=jnp.float32)
    w2 = make_weights(D2, theta=10000.0)
    ref2 = x2[:, None] * w2[None, :]
    emb2 = jax.block_until_ready(
        sinusoidal_embedding(x2, w2, tile_n=128, tile_d=128))
    assert emb2.shape == (N2, D2)
    assert jnp.allclose(emb2, ref2, atol=1e-6, rtol=1e-6)

    # --- automatic tile selection (tile == full dims, single block) ---
    emb2b = jax.block_until_ready(sinusoidal_embedding(x2, w2))
    assert jnp.allclose(emb2b, ref2, atol=1e-6, rtol=1e-6)

    # --- bf16 output path (halves HBM write traffic; multiply stays f32) ---
    emb_bf16 = jax.block_until_ready(
        sinusoidal_embedding(x2, w2, out_dtype=jnp.bfloat16))
    assert emb_bf16.dtype == jnp.bfloat16
    assert jnp.allclose(emb_bf16.astype(jnp.float32), ref2, atol=2e-2, rtol=2e-2)

    print("KERNEL_OK")
</pallas_src>

<mosaic_0001>
module attributes {stable_mosaic.version = 11 : i64} {
  func.func @_sinusoidal_kernel(%arg0: i32, %arg1: i32, %arg2: memref<8x1xf32, #tpu.memory_space<vmem>>, %arg3: memref<1x32xf32, #tpu.memory_space<vmem>>, %arg4: memref<8x32xf32, #tpu.memory_space<vmem>>) attributes {dimension_semantics = [#tpu.dimension_semantics<parallel>, #tpu.dimension_semantics<parallel>], iteration_bounds = array<i64: 1, 1>, scalar_prefetch = 0 : i64, scratch_operands = 0 : i64, tpu.core_type = #tpu.core_type<tc>, window_params = [{transform_indices = @transform_0, window_bounds = array<i64: 8, 1>}, {transform_indices = @transform_1, window_bounds = array<i64: 1, 32>}, {transform_indices = @transform_2, window_bounds = array<i64: 8, 32>}]} {
    %c0 = arith.constant 0 : index
    %c0_0 = arith.constant 0 : index
    %0 = vector.load %arg2[%c0, %c0_0] : memref<8x1xf32, #tpu.memory_space<vmem>>, vector<8x1xf32>
    %c0_1 = arith.constant 0 : index
    %c0_2 = arith.constant 0 : index
    %1 = vector.load %arg3[%c0_1, %c0_2] : memref<1x32xf32, #tpu.memory_space<vmem>>, vector<1x32xf32>
    %2 = vector.broadcast %0 : vector<8x1xf32> to vector<8x32xf32>
    %3 = vector.broadcast %1 : vector<1x32xf32> to vector<8x32xf32>
    %4 = arith.mulf %2, %3 : vector<8x32xf32>
    %c0_3 = arith.constant 0 : index
    %c0_4 = arith.constant 0 : index
    %5 = vector.load %arg4[%c0_3, %c0_4] : memref<8x32xf32, #tpu.memory_space<vmem>>, vector<8x32xf32>
    tpu.vector_store %arg4[%c0_3, %c0_4], %4 {strides = array<i32>} : memref<8x32xf32, #tpu.memory_space<vmem>>, vector<8x32xf32>,
    return
  }
  func.func @transform_0(%arg0: i32, %arg1: i32) -> (i32, i32) {
    %c0_i32 = arith.constant 0 : i32
    %c0_i32_0 = arith.constant 0 : i32
    return %arg0, %c0_i32 : i32, i32
  }
  func.func @transform_1(%arg0: i32, %arg1: i32) -> (i32, i32) {
    %c0_i32 = arith.constant 0 : i32
    %c0_i32_0 = arith.constant 0 : i32
    return %c0_i32, %arg1 : i32, i32
  }
  func.func @transform_2(%arg0: i32, %arg1: i32) -> (i32, i32) {
    %c0_i32 = arith.constant 0 : i32
    return %arg0, %arg1 : i32, i32
  }
}

</mosaic_0001>

<llo_original>
// kernel: tpu_custom_call.1
$region0: #{tpu_custom_call.1}
  #allocation0 [shape = 'u32[]', space=smem, size = 0x4, offset = 0x4, fixed_abs, tag = 'smem constant byte address 0x4 - core index']
  #allocation1 [shape = 'u32[72,128]{1,0:T(1,128)}', space=vmem, size = 0x9000, scoped, tag = 'internal scratch']
  %s0 = inlined_call_operand.vmem [shape: f32[8,1], index: 0, kind: input, shape index: {}]
  %s1 = inlined_call_operand.vmem [shape: f32[1,32], index: 1, kind: input, shape index: {}]
  %s2 = inlined_call_operand.hbm [shape: f32[8,32], index: 2, kind: output, shape index: {}]
  %s3 = sld [smem:[#allocation0]]
  $region18: #{tpu_custom_call.1} parent=0
    _
  %s5 = ssub.s32 1, %s3
  %s6 = scalar_select 0, %s5, %s3
  $region1: #{tpu_custom_call.1} parent=0
    #allocation2 [shape = 'u8[4096]{0}', space=vmem, size = 0x1000, scoped, tag = 'output window, operand 0, single buffered']
    #allocation3 [shape = 's32[1]{0}', space=sflag, size = 0x4, scoped, tag = 'scoped memory for tpu_custom_call.1']
    %7 = vsyncpa [#allocation3], 0
    // Predicated region
    $region2: #{tpu_custom_call.1} parent=1 // pred_check
      _
    $region3: #{tpu_custom_call.1} parent=1 // pred_check_branch
      %9 = sbr.rel (0) target = $region5
    $region4: #{tpu_custom_call.1} parent=1 // pred_region
      _
    $region5: #{tpu_custom_call.1} parent=1 // pred_fallthru
      _
    // Predicated region
    $region6: #{tpu_custom_call.1} parent=1 // pred_check
      _
    $region7: #{tpu_custom_call.1} parent=1 // pred_check_branch
      %11 = sbr.rel (0) target = $region9
    $region8: #{tpu_custom_call.1} parent=1 // pred_region
      _
    $region9: #{tpu_custom_call.1} parent=1 // pred_fallthru
      _
    %v12 = vld [vmem:[%s0] sm:$0xff]
    %v13 = vld [vmem:[%s1] sm:$0x1]
    %15 = vset.pattern.permute.xlu0 0
    %16 = vperm.xlu0 %15, %v12
    %v17 = vpop.permute.xlu0 %16
    %v20 = vperm.slane %v13, 0
    %v22 = vmul.f32 %v17, %v20
    %vm23 = vcmask 261120
    %24 = vst.msk [vmem:[#allocation2] sm:$0xff] %vm23, %v22
    // Predicated region
    $region10: #{tpu_custom_call.1} parent=1 // pred_check
      _
    $region11: #{tpu_custom_call.1} parent=1 // pred_check_branch
      %26 = sbr.rel (0) target = $region13
    $region12: #{tpu_custom_call.1} parent=1 // pred_region
      %28 = vsyncadd [#allocation3], 0
      %s30 = sshll.u32 [#allocation2], 4
      %s31 = int_to_ptr.vmem [resolvable:$true] %s30
      %s32 = sshll.u32 %s2, 4
      %s33 = int_to_ptr.hbm [resolvable:$true] %s32
      %35 = dma.vmem_to_hbm [thread:$0]  %s31, 128, %s33, [#allocation3]
    $region13: #{tpu_custom_call.1} parent=1 // pred_fallthru
      _
    // Predicated region
    $region14: #{tpu_custom_call.1} parent=1 // pred_check
      _
    $region15: #{tpu_custom_call.1} parent=1 // pred_check_branch
      %37 = sbr.rel (0) target = $region17
    $region16: #{tpu_custom_call.1} parent=1 // pred_region
      %39 = dma.done [#allocation3], 128
    $region17: #{tpu_custom_call.1} parent=1 // pred_fallthru
      _
    %40 = vsyncpa [#allocation3], 1

</llo_original>
